<compile_context>
chip_gen: v7x
topology: tpu7x:2x2x1
jax: 0.10.0
libtpu: 0.0.40
codegen_flags: <defaults>
</compile_context>

<pallas_src>
from functools import partial

import numpy as np
import jax
import jax.numpy as jnp
from jax.experimental import pallas as pl
from jax.experimental.pallas import tpu as pltpu


# ----------------------------------------------------------------------------
# Deterministic weight construction (numpy, faithful transcription of the
# PyTorch module's fill_weights_* methods).
# ----------------------------------------------------------------------------
def _compute_padding(kernel_size: int) -> int:
    return kernel_size // 2 - 1 if kernel_size % 2 == 0 else kernel_size // 2


def fill_weights_nn(r: int, s: int) -> np.ndarray:
    k = s + 1
    weight = np.zeros([r * r, 1, 1, k, k], dtype=np.float32)
    a = s / r / 2
    nearest = np.round(np.linspace(a, s, r)).astype(int)
    nx, ny = np.meshgrid(nearest, nearest)
    for q, (y, x) in enumerate(zip(nx.flatten(), ny.flatten())):
        weight[q, 0, 0, x, y] = 1.0
    return weight


def fill_weights_bilinear(r: int, s: int) -> np.ndarray:
    k = s + 1
    weight = np.zeros([r * r, 1, 1, k, k], dtype=np.float32)
    a = s / r / 2
    nearest = np.linspace(0, s - a, r)
    ny, nx = np.meshgrid(nearest, nearest)
    for q, (x, y) in enumerate(zip(nx.flatten(), ny.flatten())):
        x0, x1 = int(np.floor(x)), int(np.ceil(x))
        y0, y1 = int(np.floor(y)), int(np.ceil(y))
        if x1 == x0:
            x1 += 1
        if y1 == y0:
            y1 += 1
        weight[q, 0, 0, x0, y0] += (x1 - x) * (y1 - y)
        weight[q, 0, 0, x0, min(y1, k - 1)] += (x1 - x) * (y - y0)
        weight[q, 0, 0, min(x1, k - 1), y0] += (x - x0) * (y1 - y)
        weight[q, 0, 0, min(x1, k - 1), min(y1, k - 1)] += (x - x0) * (y - y0)
    return weight


def fill_weights_bicubic(r: int, s: int) -> np.ndarray:
    k = s + 3
    weight = np.zeros([r * r, 1, 1, k, k], dtype=np.float32)
    nearest = np.linspace(1, s, r)
    ny, nx = np.meshgrid(nearest, nearest)

    def gw(d):
        a = -1.0
        x = abs(float(d))
        if 0 <= x < 1:
            return (a + 2.0) * x ** 3 - (a + 3.0) * x ** 2 + 1
        elif 1 <= x < 2:
            return a * x ** 3 - 5.0 * a * x ** 2 + 8.0 * a * x - 4.0 * a
        return 0.0

    for q, (x, y) in enumerate(zip(nx.flatten(), ny.flatten())):
        x0, x1, x2, x3 = (int(np.floor(x)) - 1, int(np.floor(x)),
                          int(np.ceil(x)), int(np.ceil(x)) + 1)
        y0, y1, y2, y3 = (int(np.floor(y)) - 1, int(np.floor(y)),
                          int(np.ceil(y)), int(np.ceil(y)) + 1)
        if x1 == x2:
            x2 += 1
            x3 += 1
        if y1 == y2:
            y2 += 1
            y3 += 1
        Ax = np.array([[gw(x - x0), gw(x - x1), gw(x2 - x), gw(x3 - x)]])
        Ay = np.array([[gw(y - y0), gw(y - y1), gw(y2 - y), gw(y3 - y)]])
        W = Ay.T @ Ax
        W = W / W.sum()
        weight[q, 0, 0, x0:x0 + 4, y0:y0 + 4] = W
    return weight.astype(np.float32)


_WEIGHT_FNS = {
    "nearest": fill_weights_nn,        # cv2.INTER_NEAREST (module default)
    "linear": fill_weights_bilinear,   # cv2.INTER_LINEAR
    "cubic": fill_weights_bicubic,     # cv2.INTER_CUBIC
}


# ----------------------------------------------------------------------------
# helpers
# ----------------------------------------------------------------------------
def _round_up(x: int, m: int) -> int:
    return ((x + m - 1) // m) * m


def _query_vmem_capacity() -> int:
    try:
        info = pltpu.get_tpu_info()
        cap = int(getattr(info, "vmem_capacity_bytes", 0))
        if cap > 0:
            return cap
    except Exception:
        pass
    return 64 * 2 ** 20  # conservative fallback (v7x: 64 MiB per TensorCore)


_VMEM_CAP = _query_vmem_capacity()


def _build_tap_groups(wq: np.ndarray, r: int, s: int):
    """Group nonzero conv taps by unique (phase, row-offset, col-offset)."""
    rr, k, _ = wq.shape
    per_q = []
    for q in range(rr):
        taps = []
        for kh in range(k):
            for kw in range(k):
                w = float(wq[q, kh, kw])
                if w != 0.0:
                    taps.append(((kh % s) * s + (kw % s), kh // s, kw // s, w))
        assert taps, f"all-zero weight row for sub-pixel plane {q}"
        per_q.append(taps)
    groups = {}
    for q, taps in enumerate(per_q):
        for (p, h0, w0, w) in taps:
            groups.setdefault((p, h0, w0), []).append((q, w))
    return sorted(groups.items())


# ----------------------------------------------------------------------------
# Forward pass (mirrors FullyConvolutionalFractionalScaling2D.forward with
# is_inner_layer=False).
# ----------------------------------------------------------------------------
def _fractional_scale_impl(inp: jax.Array, r: int, s: int, mode: str,
                           vmem_budget_bytes) -> jax.Array:
    squeeze_batch = (inp.ndim == 3)
    x = inp[None] if squeeze_batch else inp                  # (N, H, W, C)
    if not jnp.issubdtype(x.dtype, jnp.floating):
        x = x.astype(jnp.float32)
    N, H, W, C = x.shape
    NC = N * C
    in_dtype = x.dtype
    in_itemsize = jnp.dtype(in_dtype).itemsize

    wq = _WEIGHT_FNS[mode](r, s)[:, 0, 0]                    # (r^2, k, k)
    k = int(wq.shape[-1])
    pad = _compute_padding(s + 1)                            # module always pads with s+1
    Hp, Wp = H + 2 * pad, W + 2 * pad
    Hout = (Hp - k) // s + 1
    Wout = (Wp - k) // s + 1
    halo = (k - 1) // s                                      # max polyphase row/col offset

    Wq = max(-(-Wp // s), Wout + halo)
    Hq_full = max(-(-Hp // s), Hout + halo)

    # ---- VMEM-aware tiling: NC blocking first, Hout row blocking as fallback ----
    cap = _VMEM_CAP
    if vmem_budget_bytes is not None:
        budget = int(vmem_budget_bytes)
    else:
        budget = int(min(64 * 2 ** 20, max(16 * 2 ** 20, cap // 2 - 8 * 2 ** 20)))

    sub_in = 8 if in_itemsize >= 4 else (16 if in_itemsize == 2 else 32)

    def in_bytes(rows):
        return s * s * _round_up(rows, sub_in) * _round_up(Wq, 128) * in_itemsize

    def out_bytes(rows):
        return r * r * _round_up(rows, 8) * _round_up(Wout, 128) * 4

    unit_full = in_bytes(Hq_full) + out_bytes(Hout)

    blk, nrb, ho_blk = 0, 1, Hout
    for d in range(1, NC + 1):        # largest NC divisor that fits and keeps >=4 steps
        if NC % d == 0 and 2 * d * unit_full <= budget and (NC // d) >= min(NC, 4):
            blk = d
    if blk == 0:
        # Full-row slab does not fit even at blk=1: block output rows (+ input halo).
        blk = 1
        ho = _round_up(Hout, 8)
        found = False
        while ho >= 8:
            n = -(-Hout // ho)
            if n >= 2 and 2 * (in_bytes(ho + halo) + out_bytes(ho)) <= budget:
                nrb, ho_blk, found = n, ho, True
                break
            ho -= 8
        if not found:
            # TODO(synk): add W-axis blocking with a column halo for extreme widths.
            nrb, ho_blk = 1, Hout

    Hout_p = nrb * ho_blk
    Hq = max(-(-Hp // s), Hout_p + halo)
    HQB = (ho_blk + halo) if nrb > 1 else Hq

    # ---- input reorg: ONE edge-pad pass + ONE combined (polyphase) transpose -----
    xp = jnp.pad(
        x,
        ((0, 0), (pad, pad + Hq * s - Hp), (pad, pad + Wq * s - Wp), (0, 0)),
        mode="edge",
    )                                                        # (N, Hq*s, Wq*s, C)
    xr = jnp.transpose(
        xp.reshape(N, Hq, s, Wq, s, C), (0, 5, 2, 4, 1, 3)
    ).reshape(NC, s * s, Hq, Wq)                             # (NC, s*s, Hq, Wq)

    if nrb > 1:
        # Halo'd row blocks, materialized only when a full-row slab overflows VMEM.
        xb = jnp.stack(
            [xr[:, :, j * ho_blk: j * ho_blk + HQB, :] for j in range(nrb)], axis=1
        )                                                    # (NC, nrb, s*s, HQB, Wq)
    else:
        xb = xr[:, None]                                     # free reshape

    need = 2 * blk * (in_bytes(HQB) + out_bytes(ho_blk))     # double-buffered in + out
    vmem_limit = int(min(cap - 8 * 2 ** 20, max(48 * 2 ** 20, need + 16 * 2 ** 20)))

    tap_groups = _build_tap_groups(wq, r, s)

    # TODO(synk): separable two-pass bicubic (4+4 taps) to halve VALU work on v5e.
    def kernel(x_ref, o_ref):
        # x_ref: (blk, 1, s*s, HQB, Wq)   polyphase input, caller dtype (lane = Wq)
        # o_ref: (blk, r*r, ho_blk, Wout) f32 sub-pixel planes (lane = Wout)
        written = [False] * (r * r)
        for (p, h0, w0), uses in tap_groups:
            tap = x_ref[:, 0, p, pl.ds(h0, ho_blk), pl.ds(w0, Wout)]
            tap = tap.astype(jnp.float32)
            for (q, wgt) in uses:
                term = tap if wgt == 1.0 else tap * wgt
                if written[q]:
                    o_ref[:, q, :, :] = o_ref[:, q, :, :] + term
                else:
                    o_ref[:, q, :, :] = term
                    written[q] = True

    y = pl.pallas_call(
        kernel,
        out_shape=jax.ShapeDtypeStruct((NC, r * r, Hout_p, Wout), jnp.float32),
        grid_spec=pltpu.PrefetchScalarGridSpec(
            num_scalar_prefetch=0,
            grid=(NC // blk, nrb),
            in_specs=[pl.BlockSpec((blk, 1, s * s, HQB, Wq),
                                   lambda i, j: (i, j, 0, 0, 0))],
            out_specs=pl.BlockSpec((blk, r * r, ho_blk, Wout),
                                   lambda i, j: (i, 0, j, 0)),
        ),
        compiler_params=pltpu.CompilerParams(
            dimension_semantics=("parallel", "parallel"),
            vmem_limit_bytes=vmem_limit,
        ),
    )(xb)

    if Hout_p != Hout:
        y = y[:, :, :Hout, :]

    # Single fused pixel-shuffle (q = a*r + b) + NHWC decode: ONE transpose pass.
    # TODO(synk): fuse the column interleave into the kernel's output slab (needs a
    # supported (Wout, r)->(Wout*r) lane relayout or lane-strided stores); with a
    # C-as-lane layout for C >= 128 the decode transpose would vanish entirely.
    y = y.reshape(N, C, r, r, Hout, Wout)
    res = jnp.transpose(y, (0, 4, 2, 5, 3, 1)).reshape(N, Hout * r, Wout * r, C)
    if squeeze_batch:
        res = res[0]
    return res


@partial(jax.jit, static_argnums=(1, 2, 3, 4))
def _fractional_scale_jit(inp, r, s, mode, vmem_budget_bytes):
    return _fractional_scale_impl(inp, r, s, mode, vmem_budget_bytes)


def fully_conv_fractional_scale_2d(inp, r, s, mode="nearest",
                                   vmem_budget_bytes=None):
    return _fractional_scale_jit(inp, r, s, mode, vmem_budget_bytes)


# ----------------------------------------------------------------------------
# Plain-JAX reference (mirrors the PyTorch forward) for the correctness check.
# ----------------------------------------------------------------------------
def _reference(x_nhwc, r, s, mode):
    wq = _WEIGHT_FNS[mode](r, s)[:, 0, 0]
    k = wq.shape[-1]
    pad = _compute_padding(s + 1)
    x = jnp.transpose(x_nhwc, (0, 3, 1, 2)).astype(jnp.float32)
    xp = jnp.pad(x, ((0, 0), (0, 0), (pad, pad), (pad, pad)), mode="edge")
    N, C, Hp, Wp = xp.shape
    Hout = (Hp - k) // s + 1
    Wout = (Wp - k) // s + 1
    planes = []
    for q in range(r * r):
        acc = jnp.zeros((N, C, Hout, Wout), jnp.float32)
        for kh in range(k):
            for kw in range(k):
                w = float(wq[q, kh, kw])
                if w != 0.0:
                    acc = acc + w * xp[:, :, kh:kh + Hout * s:s, kw:kw + Wout * s:s]
        planes.append(acc)
    y = jnp.stack(planes, axis=2).reshape(N, C, r, r, Hout, Wout)
    y = jnp.transpose(y, (0, 1, 4, 2, 5, 3)).reshape(N, C, Hout * r, Wout * r)
    return jnp.transpose(y, (0, 2, 3, 1))


if __name__ == "__main__":
    r, s = 3, 2                   # fractional scale factor r/s = 1.5
    N, H, W, C = 2, 16, 16, 4
    key = jax.random.PRNGKey(0)
    x = jax.random.uniform(key, (N, H, W, C), dtype=jnp.float32)

    out = fully_conv_fractional_scale_2d(x, r, s, "nearest")
    out = jax.block_until_ready(out)

    # expected output spatial size: ((H + 2*pad - (s+1)) // s + 1) * r
    pad = _compute_padding(s + 1)
    Hexp = ((H + 2 * pad - (s + 1)) // s + 1) * r
    assert out.shape == (N, Hexp, Hexp, C), out.shape

    # correctness vs. plain-JAX reference for all three interpolation modes
    for mode in ("nearest", "linear", "cubic"):
        got = jax.block_until_ready(fully_conv_fractional_scale_2d(x, r, s, mode))
        ref = _reference(x, r, s, mode)
        assert got.shape == ref.shape, (mode, got.shape, ref.shape)
        assert jnp.allclose(got, ref, atol=1e-5, rtol=1e-5), mode

    # exercise the row-blocked (halo) path + padded-output slicing with a forced
    # tiny VMEM budget (this is what large frames / tiny NC hit on v7x)
    x2 = jax.random.uniform(jax.random.PRNGKey(1), (1, 56, 56, 2), dtype=jnp.float32)
    got2 = jax.block_until_ready(
        fully_conv_fractional_scale_2d(x2, r, s, "linear", 260_000))
    ref2 = _reference(x2, r, s, "linear")
    assert got2.shape == ref2.shape, (got2.shape, ref2.shape)
    assert jnp.allclose(got2, ref2, atol=1e-5, rtol=1e-5)

    print("KERNEL_OK")
</pallas_src>

<mosaic_0001>
module attributes {stable_mosaic.version = 11 : i64} {
  func.func @kernel(%arg0: i32, %arg1: i32, %arg2: memref<2x1x4x9x9xf32, #tpu.memory_space<vmem>>, %arg3: memref<2x9x8x8xf32, #tpu.memory_space<vmem>>) attributes {dimension_semantics = [#tpu.dimension_semantics<parallel>, #tpu.dimension_semantics<parallel>], iteration_bounds = array<i64: 4, 1>, scalar_prefetch = 0 : i64, scratch_operands = 0 : i64, tpu.core_type = #tpu.core_type<tc>, window_params = [{transform_indices = @transform_0, window_bounds = array<i64: 2, 1, 4, 9, 9>}, {transform_indices = @transform_1, window_bounds = array<i64: 2, 9, 8, 8>}]} {
    %c0 = arith.constant 0 : index
    %c0_0 = arith.constant 0 : index
    %c0_1 = arith.constant 0 : index
    %c0_2 = arith.constant 0 : index
    %c0_3 = arith.constant 0 : index
    %0 = vector.load %arg2[%c0, %c0_0, %c0_1, %c0_2, %c0_3] : memref<2x1x4x9x9xf32, #tpu.memory_space<vmem>>, vector<2x1x1x8x8xf32>
    %1 = vector.shape_cast %0 : vector<2x1x1x8x8xf32> to vector<2x8x8xf32>
    %c0_4 = arith.constant 0 : index
    %c0_5 = arith.constant 0 : index
    %c0_6 = arith.constant 0 : index
    %c0_7 = arith.constant 0 : index
    %2 = vector.load %arg3[%c0_4, %c0_5, %c0_6, %c0_7] : memref<2x9x8x8xf32, #tpu.memory_space<vmem>>, vector<2x1x8x8xf32>
    %3 = vector.shape_cast %2 : vector<2x1x8x8xf32> to vector<2x8x8xf32>
    %4 = vector.shape_cast %1 : vector<2x8x8xf32> to vector<2x1x8x8xf32>
    tpu.vector_store %arg3[%c0_4, %c0_5, %c0_6, %c0_7], %4 {strides = array<i32>} : memref<2x9x8x8xf32, #tpu.memory_space<vmem>>, vector<2x1x8x8xf32>,
    %c0_8 = arith.constant 0 : index
    %c0_9 = arith.constant 0 : index
    %c0_10 = arith.constant 0 : index
    %c0_11 = arith.constant 0 : index
    %c1 = arith.constant 1 : index
    %5 = vector.load %arg2[%c0_8, %c0_9, %c0_10, %c0_11, %c1] : memref<2x1x4x9x9xf32, #tpu.memory_space<vmem>>, vector<2x1x1x8x8xf32>
    %6 = vector.shape_cast %5 : vector<2x1x1x8x8xf32> to vector<2x8x8xf32>
    %c0_12 = arith.constant 0 : index
    %c2 = arith.constant 2 : index
    %c0_13 = arith.constant 0 : index
    %c0_14 = arith.constant 0 : index
    %7 = vector.load %arg3[%c0_12, %c2, %c0_13, %c0_14] : memref<2x9x8x8xf32, #tpu.memory_space<vmem>>, vector<2x1x8x8xf32>
    %8 = vector.shape_cast %7 : vector<2x1x8x8xf32> to vector<2x8x8xf32>
    %9 = vector.shape_cast %6 : vector<2x8x8xf32> to vector<2x1x8x8xf32>
    tpu.vector_store %arg3[%c0_12, %c2, %c0_13, %c0_14], %9 {strides = array<i32>} : memref<2x9x8x8xf32, #tpu.memory_space<vmem>>, vector<2x1x8x8xf32>,
    %c0_15 = arith.constant 0 : index
    %c0_16 = arith.constant 0 : index
    %c0_17 = arith.constant 0 : index
    %c1_18 = arith.constant 1 : index
    %c0_19 = arith.constant 0 : index
    %10 = vector.load %arg2[%c0_15, %c0_16, %c0_17, %c1_18, %c0_19] : memref<2x1x4x9x9xf32, #tpu.memory_space<vmem>>, vector<2x1x1x8x8xf32>
    %11 = vector.shape_cast %10 : vector<2x1x1x8x8xf32> to vector<2x8x8xf32>
    %c0_20 = arith.constant 0 : index
    %c6 = arith.constant 6 : index
    %c0_21 = arith.constant 0 : index
    %c0_22 = arith.constant 0 : index
    %12 = vector.load %arg3[%c0_20, %c6, %c0_21, %c0_22] : memref<2x9x8x8xf32, #tpu.memory_space<vmem>>, vector<2x1x8x8xf32>
    %13 = vector.shape_cast %12 : vector<2x1x8x8xf32> to vector<2x8x8xf32>
    %14 = vector.shape_cast %11 : vector<2x8x8xf32> to vector<2x1x8x8xf32>
    tpu.vector_store %arg3[%c0_20, %c6, %c0_21, %c0_22], %14 {strides = array<i32>} : memref<2x9x8x8xf32, #tpu.memory_space<vmem>>, vector<2x1x8x8xf32>,
    %c0_23 = arith.constant 0 : index
    %c0_24 = arith.constant 0 : index
    %c0_25 = arith.constant 0 : index
    %c1_26 = arith.constant 1 : index
    %c1_27 = arith.constant 1 : index
    %15 = vector.load %arg2[%c0_23, %c0_24, %c0_25, %c1_26, %c1_27] : memref<2x1x4x9x9xf32, #tpu.memory_space<vmem>>, vector<2x1x1x8x8xf32>
    %16 = vector.shape_cast %15 : vector<2x1x1x8x8xf32> to vector<2x8x8xf32>
    %c0_28 = arith.constant 0 : index
    %c8 = arith.constant 8 : index
    %c0_29 = arith.constant 0 : index
    %c0_30 = arith.constant 0 : index
    %17 = vector.load %arg3[%c0_28, %c8, %c0_29, %c0_30] : memref<2x9x8x8xf32, #tpu.memory_space<vmem>>, vector<2x1x8x8xf32>
    %18 = vector.shape_cast %17 : vector<2x1x8x8xf32> to vector<2x8x8xf32>
    %19 = vector.shape_cast %16 : vector<2x8x8xf32> to vector<2x1x8x8xf32>
    tpu.vector_store %arg3[%c0_28, %c8, %c0_29, %c0_30], %19 {strides = array<i32>} : memref<2x9x8x8xf32, #tpu.memory_space<vmem>>, vector<2x1x8x8xf32>,
    %c0_31 = arith.constant 0 : index
    %c0_32 = arith.constant 0 : index
    %c1_33 = arith.constant 1 : index
    %c0_34 = arith.constant 0 : index
    %c0_35 = arith.constant 0 : index
    %20 = vector.load %arg2[%c0_31, %c0_32, %c1_33, %c0_34, %c0_35] : memref<2x1x4x9x9xf32, #tpu.memory_space<vmem>>, vector<2x1x1x8x8xf32>
    %21 = vector.shape_cast %20 : vector<2x1x1x8x8xf32> to vector<2x8x8xf32>
    %c0_36 = arith.constant 0 : index
    %c1_37 = arith.constant 1 : index
    %c0_38 = arith.constant 0 : index
    %c0_39 = arith.constant 0 : index
    %22 = vector.load %arg3[%c0_36, %c1_37, %c0_38, %c0_39] : memref<2x9x8x8xf32, #tpu.memory_space<vmem>>, vector<2x1x8x8xf32>
    %23 = vector.shape_cast %22 : vector<2x1x8x8xf32> to vector<2x8x8xf32>
    %24 = vector.shape_cast %21 : vector<2x8x8xf32> to vector<2x1x8x8xf32>
    tpu.vector_store %arg3[%c0_36, %c1_37, %c0_38, %c0_39], %24 {strides = array<i32>} : memref<2x9x8x8xf32, #tpu.memory_space<vmem>>, vector<2x1x8x8xf32>,
    %c0_40 = arith.constant 0 : index
    %c0_41 = arith.constant 0 : index
    %c1_42 = arith.constant 1 : index
    %c1_43 = arith.constant 1 : index
    %c0_44 = arith.constant 0 : index
    %25 = vector.load %arg2[%c0_40, %c0_41, %c1_42, %c1_43, %c0_44] : memref<2x1x4x9x9xf32, #tpu.memory_space<vmem>>, vector<2x1x1x8x8xf32>
    %26 = vector.shape_cast %25 : vector<2x1x1x8x8xf32> to vector<2x8x8xf32>
    %c0_45 = arith.constant 0 : index
    %c7 = arith.constant 7 : index
    %c0_46 = arith.constant 0 : index
    %c0_47 = arith.constant 0 : index
    %27 = vector.load %arg3[%c0_45, %c7, %c0_46, %c0_47] : memref<2x9x8x8xf32, #tpu.memory_space<vmem>>, vector<2x1x8x8xf32>
    %28 = vector.shape_cast %27 : vector<2x1x8x8xf32> to vector<2x8x8xf32>
    %29 = vector.shape_cast %26 : vector<2x8x8xf32> to vector<2x1x8x8xf32>
    tpu.vector_store %arg3[%c0_45, %c7, %c0_46, %c0_47], %29 {strides = array<i32>} : memref<2x9x8x8xf32, #tpu.memory_space<vmem>>, vector<2x1x8x8xf32>,
    %c0_48 = arith.constant 0 : index
    %c0_49 = arith.constant 0 : index
    %c2_50 = arith.constant 2 : index
    %c0_51 = arith.constant 0 : index
    %c0_52 = arith.constant 0 : index
    %30 = vector.load %arg2[%c0_48, %c0_49, %c2_50, %c0_51, %c0_52] : memref<2x1x4x9x9xf32, #tpu.memory_space<vmem>>, vector<2x1x1x8x8xf32>
    %31 = vector.shape_cast %30 : vector<2x1x1x8x8xf32> to vector<2x8x8xf32>
    %c0_53 = arith.constant 0 : index
    %c3 = arith.constant 3 : index
    %c0_54 = arith.constant 0 : index
    %c0_55 = arith.constant 0 : index
    %32 = vector.load %arg3[%c0_53, %c3, %c0_54, %c0_55] : memref<2x9x8x8xf32, #tpu.memory_space<vmem>>, vector<2x1x8x8xf32>
    %33 = vector.shape_cast %32 : vector<2x1x8x8xf32> to vector<2x8x8xf32>
    %34 = vector.shape_cast %31 : vector<2x8x8xf32> to vector<2x1x8x8xf32>
    tpu.vector_store %arg3[%c0_53, %c3, %c0_54, %c0_55], %34 {strides = array<i32>} : memref<2x9x8x8xf32, #tpu.memory_space<vmem>>, vector<2x1x8x8xf32>,
    %c0_56 = arith.constant 0 : index
    %c0_57 = arith.constant 0 : index
    %c2_58 = arith.constant 2 : index
    %c0_59 = arith.constant 0 : index
    %c1_60 = arith.constant 1 : index
    %35 = vector.load %arg2[%c0_56, %c0_57, %c2_58, %c0_59, %c1_60] : memref<2x1x4x9x9xf32, #tpu.memory_space<vmem>>, vector<2x1x1x8x8xf32>
    %36 = vector.shape_cast %35 : vector<2x1x1x8x8xf32> to vector<2x8x8xf32>
    %c0_61 = arith.constant 0 : index
    %c5 = arith.constant 5 : index
    %c0_62 = arith.constant 0 : index
    %c0_63 = arith.constant 0 : index
    %37 = vector.load %arg3[%c0_61, %c5, %c0_62, %c0_63] : memref<2x9x8x8xf32, #tpu.memory_space<vmem>>, vector<2x1x8x8xf32>
    %38 = vector.shape_cast %37 : vector<2x1x8x8xf32> to vector<2x8x8xf32>
    %39 = vector.shape_cast %36 : vector<2x8x8xf32> to vector<2x1x8x8xf32>
    tpu.vector_store %arg3[%c0_61, %c5, %c0_62, %c0_63], %39 {strides = array<i32>} : memref<2x9x8x8xf32, #tpu.memory_space<vmem>>, vector<2x1x8x8xf32>,
    %c0_64 = arith.constant 0 : index
    %c0_65 = arith.constant 0 : index
    %c3_66 = arith.constant 3 : index
    %c0_67 = arith.constant 0 : index
    %c0_68 = arith.constant 0 : index
    %40 = vector.load %arg2[%c0_64, %c0_65, %c3_66, %c0_67, %c0_68] : memref<2x1x4x9x9xf32, #tpu.memory_space<vmem>>, vector<2x1x1x8x8xf32>
    %41 = vector.shape_cast %40 : vector<2x1x1x8x8xf32> to vector<2x8x8xf32>
    %c0_69 = arith.constant 0 : index
    %c4 = arith.constant 4 : index
    %c0_70 = arith.constant 0 : index
    %c0_71 = arith.constant 0 : index
    %42 = vector.load %arg3[%c0_69, %c4, %c0_70, %c0_71] : memref<2x9x8x8xf32, #tpu.memory_space<vmem>>, vector<2x1x8x8xf32>
    %43 = vector.shape_cast %42 : vector<2x1x8x8xf32> to vector<2x8x8xf32>
    %44 = vector.shape_cast %41 : vector<2x8x8xf32> to vector<2x1x8x8xf32>
    tpu.vector_store %arg3[%c0_69, %c4, %c0_70, %c0_71], %44 {strides = array<i32>} : memref<2x9x8x8xf32, #tpu.memory_space<vmem>>, vector<2x1x8x8xf32>,
    return
  }
  func.func @transform_0(%arg0: i32, %arg1: i32) -> (i32, i32, i32, i32, i32) {
    %c0_i32 = arith.constant 0 : i32
    %c0_i32_0 = arith.constant 0 : i32
    %c0_i32_1 = arith.constant 0 : i32
    %c0_i32_2 = arith.constant 0 : i32
    return %arg0, %arg1, %c0_i32, %c0_i32_0, %c0_i32_1 : i32, i32, i32, i32, i32
  }
  func.func @transform_1(%arg0: i32, %arg1: i32) -> (i32, i32, i32, i32) {
    %c0_i32 = arith.constant 0 : i32
    %c0_i32_0 = arith.constant 0 : i32
    %c0_i32_1 = arith.constant 0 : i32
    return %arg0, %c0_i32, %arg1, %c0_i32_0 : i32, i32, i32, i32
  }
}

</mosaic_0001>

<llo_original>
// kernel: _fractional_scale_jit.1
$region0: #{_fractional_scale_jit.1}
  #allocation0 [shape = 'u32[]', space=smem, size = 0x4, offset = 0x4, fixed_abs, tag = 'smem constant byte address 0x4 - core index']
  #allocation1 [shape = 'u32[144,128]{1,0:T(1,128)}', space=vmem, size = 0x12000, scoped, tag = 'internal scratch']
  %s0 = inlined_call_operand.vmem [shape: f32[8,1,4,9,9], index: 0, kind: input, shape index: {}]
  %s1 = inlined_call_operand.vmem [shape: f32[8,9,8,8], index: 1, kind: output, shape index: {}]
  %s2 = sld [smem:[#allocation0]]
  $region37: #{_fractional_scale_jit.1} parent=0
    _
  %s4 = ssub.s32 1, %s2
  %s5 = scalar_select 0, %s4, %s2
  loop: start=0, step=1, limit=6
  $region2: #{_fractional_scale_jit.1} parent=0 // loop_pre_header
    _
  $region3: #{_fractional_scale_jit.1} parent=0 // loop_header
    %s7 = sphi 0, %s11
    %p8 = scmp.ge.s32.totalorder %s7, 6
    %s14 = sphi 0, %s26
    %s15 = sphi 0, %s22
    %s16 = sphi 0, %s14
    %s17 = sphi 0, %s15
    %s18 = sphi 0, %s16
    %s19 = sphi 0, %s17
    %s31 = sphi 0, %s33
    %s34 = sphi 0, %s31
    %s35 = sphi 0, %s34
    %s51 = sphi 0, %s35
    %s59 = sphi 0, %s61
    %s62 = sphi 0, %s59
    %s63 = sphi 0, %s62
    %s79 = sphi 0, %s63
  $region4: #{_fractional_scale_jit.1} parent=0 // loop_header_branch
    %10 = sbr.rel (%p8) target = $region8
  $region5: #{_fractional_scale_jit.1} parent=0 // loop_body
    %s12 = ssub.s32 %s7, 1
    %s13 = ssub.s32 %s7, 2
    %s20 = sadd.s32 1, %s15
    %p21 = scmp.ge.s32.totalorder %s20, 1
    %s22 = scalar_select %p21, 0, %s20
    %s23 = sadd.s32 1, %s14
    %s24 = scalar_select %p21, %s23, %s14
    %p25 = scmp.ge.s32.totalorder %s24, 4
    %s26 = scalar_select %p25, 0, %s24
    %s27 = ssub.s32 %s14, %s26
    %s28 = ssub.s32 %s15, %s22
    %s29 = sor.u32 %s27, %s28
    %p30 = scmp.eq.s32.totalorder %s29, 0
    %s32 = sadd.s32 %s31, 1
    %s33 = scalar_select %p30, %s31, %s32
    %p36 = pneg %p30
    %p37 = scmp.eq.s32.totalorder %s7, 3
    %p38 = por %p36, %p37
    %p39 = scmp.ne.s32.totalorder %s31, %s34
    %p40 = scmp.eq.s32.totalorder %s7, 0
    %p41 = por %p39, %p40
    %p42 = scmp.ne.s32.totalorder %s31, %s34
    %p43 = scmp.eq.s32.totalorder %s12, 3
    %p44 = por %p42, %p43
    %p45 = scmp.ne.s32.totalorder %s34, %s35
    %p46 = scmp.eq.s32.totalorder %s12, 0
    %p47 = por %p45, %p46
    %p48 = scmp.ne.s32.totalorder %s34, %s35
    %p49 = scmp.eq.s32.totalorder %s13, 3
    %p50 = por %p48, %p49
    %p52 = scmp.ne.s32.totalorder %s35, %s51
    %p53 = scmp.eq.s32.totalorder %s13, 0
    %p54 = por %p52, %p53
    %s55 = ssub.s32 %s14, %s26
    %s56 = ssub.s32 %s15, %s22
    %s57 = sor.u32 %s55, %s56
    %p58 = scmp.eq.s32.totalorder %s57, 0
    %s60 = sadd.s32 %s59, 1
    %s61 = scalar_select %p58, %s59, %s60
    %p64 = pneg %p58
    %p65 = scmp.eq.s32.totalorder %s7, 3
    %p66 = por %p64, %p65
    %p67 = scmp.ne.s32.totalorder %s59, %s62
    %p68 = scmp.eq.s32.totalorder %s7, 0
    %p69 = por %p67, %p68
    %p70 = scmp.ne.s32.totalorder %s59, %s62
    %p71 = scmp.eq.s32.totalorder %s12, 3
    %p72 = por %p70, %p71
    %p73 = scmp.ne.s32.totalorder %s62, %s63
    %p74 = scmp.eq.s32.totalorder %s12, 0
    %p75 = por %p73, %p74
    %p76 = scmp.ne.s32.totalorder %s62, %s63
    %p77 = scmp.eq.s32.totalorder %s13, 3
    %p78 = por %p76, %p77
    %p80 = scmp.ne.s32.totalorder %s63, %s79
    %p81 = scmp.eq.s32.totalorder %s13, 0
    %p82 = por %p80, %p81
    %p83 = scmp.le.s32.totalorder 1, %s7
    %p84 = scmp.lt.s32.totalorder %s7, 5
    %p85 = pnand %p83, %p84
    %p86 = pneg %p85
    // Predicated region
    $region9: #{_fractional_scale_jit.1} parent=5 // pred_check
      _
    $region10: #{_fractional_scale_jit.1} parent=5 // pred_check_branch
      %88 = sbr.rel (%p85) target = $region12
    $region11: #{_fractional_scale_jit.1} parent=5 // pred_region
      %s89 = ssub.s32 %s7, 1
    $region12: #{_fractional_scale_jit.1} parent=5 // pred_fallthru
      _
    %p90 = scmp.lt.s32.totalorder %s7, 4
    // Predicated region
    $region13: #{_fractional_scale_jit.1} parent=5 // pred_check
      %p91 = pneg %p90
    $region14: #{_fractional_scale_jit.1} parent=5 // pred_check_branch
      %93 = sbr.rel (%p91) target = $region16
    $region15: #{_fractional_scale_jit.1} parent=5 // pred_region
      // Predicated region
      $region17: #{_fractional_scale_jit.1} parent=15 // pred_check
        %p94 = pneg %p41
      $region18: #{_fractional_scale_jit.1} parent=15 // pred_check_branch
        %96 = sbr.rel (%p94) target = $region20
      $region19: #{_fractional_scale_jit.1} parent=15 // pred_region
        %s97 = smul.u32 2, %s14
        %p98 = scmp.lt.s32.totalorder %s97, 7
        %s99 = scalar_select %p98, %s97, 7
        %p100 = scmp.lt.s32.totalorder %s15, 0
        %s101 = scalar_select %p100, %s15, 0
        %s102 = smul.addr %s101, 8
        %s103 = smul.addr %s99, 8
        %s104 = sadd.s32 %s102, %s103
        %s105 = smul.addr %s104, 8
        %s106 = scalar_lea.vmem %s0, %s105
        %s107 = smul.u32 2, %s14
      $region20: #{_fractional_scale_jit.1} parent=15 // pred_fallthru
        _
    $region16: #{_fractional_scale_jit.1} parent=5 // pred_fallthru
      _
    %p108 = scmp.le.s32.totalorder 1, %s7
    %p109 = scmp.lt.s32.totalorder %s7, 5
    %p110 = pnand %p108, %p109
    %p111 = pneg %p110
    // Predicated region
    $region21: #{_fractional_scale_jit.1} parent=5 // pred_check
      _
    $region22: #{_fractional_scale_jit.1} parent=5 // pred_check_branch
      %113 = sbr.rel (%p110) target = $region24
    $region23: #{_fractional_scale_jit.1} parent=5 // pred_region
      %s114 = ssub.s32 %s7, 1
      %s115 = smul.u32 2, %s16
      %p116 = scmp.lt.s32.totalorder %s115, 7
      %s117 = scalar_select %p116, %s115, 7
      %p118 = scmp.lt.s32.totalorder %s17, 0
      %s119 = scalar_select %p118, %s17, 0
      %s120 = smul.addr %s119, 8
      %s121 = smul.addr %s117, 8
      %s122 = sadd.s32 %s120, %s121
      %s123 = smul.addr %s122, 8
      %s124 = scalar_lea.vmem %s0, %s123
      %p125 = pneg %p47
      %p126 = pneg %p44
      %p127 = pneg %p75
      %p128 = pneg %p72
      %s129 = smul.u32 2, %s16
      %p130 = scmp.lt.s32.totalorder %s129, 7
      %s131 = scalar_select %p130, %s129, 7
      %p132 = scmp.lt.s32.totalorder %s17, 0
      %s133 = scalar_select %p132, %s17, 0
      %s134 = smul.addr %s131, 9
      %s135 = sadd.s32 %s133, %s134
      %s136 = smul.addr %s135, 8
      %s137 = scalar_lea.vmem %s1, %s136
      %s138 = smul.u32 2, %s16
      %p139 = scmp.lt.s32.totalorder %s138, 7
      %s140 = scalar_select %p139, %s138, 7
      %p141 = scmp.lt.s32.totalorder %s17, 0
      %s142 = scalar_select %p141, %s17, 0
      %s143 = smul.addr %s142, 8
      %s144 = smul.addr %s140, 8
      %s145 = sadd.s32 %s143, %s144
      %s146 = smul.addr %s145, 8
      %s147 = scalar_lea.vmem %s0, %s146
      %s148 = smul.u32 2, %s16
      %s149 = smul.u32 2, %s16
      %p150 = scmp.lt.s32.totalorder %s149, 7
      %s151 = scalar_select %p150, %s149, 7
      %p152 = scmp.lt.s32.totalorder %s17, 0
      %s153 = scalar_select %p152, %s17, 0
      %s154 = smul.addr %s151, 9
      %s155 = sadd.s32 %s153, %s154
      %s156 = smul.addr %s155, 8
      %s157 = scalar_lea.vmem %s1, %s156
      %s158 = smul.u32 2, %s16
      %v159 = vld [vmem:[%s147] sm:$0xff]
      %v160 = vld [vmem:[%s147 + $0x40] sm:$0xff]
      %vm161 = vcmask 64512
      %162 = vst.msk [vmem:[%s157] sm:$0xff] %vm161, %v159
      %163 = vst.msk [vmem:[%s157 + $0x48] sm:$0xff] %vm161, %v160
      %v164 = vld [vmem:[%s147] sm:$0xff]
      %v165 = vld [vmem:[%s147 + $0x40] sm:$0xff]
      %168 = vrot.lane.b32.xlu0 %v164, 127
      %v169 = vpop.permute.xlu0 %168
      %170 = vrot.lane.b32.xlu0 %v165, 127
      %v171 = vpop.permute.xlu0 %170
      %s174 = scalar_lea.vmem %s157, 16
      %175 = vst.msk [vmem:[%s174] sm:$0xff] %vm161, %v169
      %176 = vst.msk [vmem:[%s174 + $0x48] sm:$0xff] %vm161, %v171
      %v177 = vld [vmem:[%s147 + $0x1] sm:$0xff]
      %v178 = vld [vmem:[%s147 + $0x41] sm:$0xff]
      %s179 = scalar_lea.vmem %s157, 48
      %180 = vst.msk [vmem:[%s179] sm:$0xff] %vm161, %v177
      %181 = vst.msk [vmem:[%s179 + $0x48] sm:$0xff] %vm161, %v178
      %v182 = vld [vmem:[%s147 + $0x1] sm:$0xff]
      %v183 = vld [vmem:[%s147 + $0x41] sm:$0xff]
      %186 = vrot.lane.b32.xlu0 %v182, 127
      %v187 = vpop.permute.xlu0 %186
      %188 = vrot.lane.b32.xlu0 %v183, 127
      %v189 = vpop.permute.xlu0 %188
      %s192 = scalar_lea.vmem %s157, 64
      %193 = vst.msk [vmem:[%s192] sm:$0xff] %vm161, %v187
      %194 = vst.msk [vmem:[%s192 + $0x48] sm:$0xff] %vm161, %v189
      %s195 = scalar_lea.vmem %s147, 16
      %v196 = vld [vmem:[%s195] sm:$0xff]
      %v197 = vld [vmem:[%s195 + $0x40] sm:$0xff]
      %s198 = scalar_lea.vmem %s157, 8
      %199 = vst.msk [vmem:[%s198] sm:$0xff] %vm161, %v196
      %200 = vst.msk [vmem:[%s198 + $0x48] sm:$0xff] %vm161, %v197
      %v201 = vld [vmem:[%s195 + $0x1] sm:$0xff]
      %v202 = vld [vmem:[%s195 + $0x41] sm:$0xff]
      %s203 = scalar_lea.vmem %s157, 56
      %204 = vst.msk [vmem:[%s203] sm:$0xff] %vm161, %v201
      %205 = vst.msk [vmem:[%s203 + $0x48] sm:$0xff] %vm161, %v202
      %s206 = scalar_lea.vmem %s147, 32
      %v207 = vld [vmem:[%s206] sm:$0xff]
      %v208 = vld [vmem:[%s206 + $0x40] sm:$0xff]
      %s209 = scalar_lea.vmem %s157, 24
      %210 = vst.msk [vmem:[%s209] sm:$0xff] %vm161, %v207
      %211 = vst.msk [vmem:[%s209 + $0x48] sm:$0xff] %vm161, %v208
      %v212 = vld [vmem:[%s206] sm:$0xff]
      %v213 = vld [vmem:[%s206 + $0x40] sm:$0xff]
      %216 = vrot.lane.b32.xlu0 %v212, 127
      %v217 = vpop.permute.xlu0 %216
      %218 = vrot.lane.b32.xlu0 %v213, 127
      %v219 = vpop.permute.xlu0 %218
      %s222 = scalar_lea.vmem %s157, 40
      %223 = vst.msk [vmem:[%s222] sm:$0xff] %vm161, %v217
      %224 = vst.msk [vmem:[%s222 + $0x48] sm:$0xff] %vm161, %v219
      %s225 = scalar_lea.vmem %s147, 48
      %v226 = vld [vmem:[%s225] sm:$0xff]
      %v227 = vld [vmem:[%s225 + $0x40] sm:$0xff]
      %s228 = scalar_lea.vmem %s157, 32
      %229 = vst.msk [vmem:[%s228] sm:$0xff] %vm161, %v226
      %230 = vst.msk [vmem:[%s228 + $0x48] sm:$0xff] %vm161, %v227
      %s231 = smul.u32 2, %s16
      %p232 = scmp.lt.s32.totalorder %s231, 7
      %s233 = scalar_select %p232, %s231, 7
      %p234 = scmp.lt.s32.totalorder %s17, 0
      %s235 = scalar_select %p234, %s17, 0
      %s236 = smul.addr %s233, 9
      %s237 = sadd.s32 %s235, %s236
      %s238 = smul.addr %s237, 8
      %s239 = scalar_lea.vmem %s1, %s238
      // Predicated region
      $region25: #{_fractional_scale_jit.1} parent=23 // pred_check
        %p240 = pneg %p72
      $region26: #{_fractional_scale_jit.1} parent=23 // pred_check_branch
        %242 = sbr.rel (%p240) target = $region28
      $region27: #{_fractional_scale_jit.1} parent=23 // pred_region
        %s243 = smul.u32 2, %s16
      $region28: #{_fractional_scale_jit.1} parent=23 // pred_fallthru
        _
    $region24: #{_fractional_scale_jit.1} parent=5 // pred_fallthru
      _
    %p244 = scmp.le.s32.totalorder 2, %s7
    // Predicated region
    $region29: #{_fractional_scale_jit.1} parent=5 // pred_check
      %p245 = pneg %p244
    $region30: #{_fractional_scale_jit.1} parent=5 // pred_check_branch
      %247 = sbr.rel (%p245) target = $region32
    $region31: #{_fractional_scale_jit.1} parent=5 // pred_region
      %s248 = ssub.s32 %s7, 2
      // Predicated region
      $region33: #{_fractional_scale_jit.1} parent=31 // pred_check
        %p249 = pneg %p78
      $region34: #{_fractional_scale_jit.1} parent=31 // pred_check_branch
        %251 = sbr.rel (%p249) target = $region36
      $region35: #{_fractional_scale_jit.1} parent=31 // pred_region
        %s252 = smul.u32 2, %s18
        %p253 = scmp.lt.s32.totalorder %s252, 7
        %s254 = scalar_select %p253, %s252, 7
        %p255 = scmp.lt.s32.totalorder %s19, 0
        %s256 = scalar_select %p255, %s19, 0
        %s257 = smul.addr %s254, 9
        %s258 = sadd.s32 %s256, %s257
        %s259 = smul.addr %s258, 8
        %s260 = scalar_lea.vmem %s1, %s259
      $region36: #{_fractional_scale_jit.1} parent=31 // pred_fallthru
        _
    $region32: #{_fractional_scale_jit.1} parent=5 // pred_fallthru
      _
  $region6: #{_fractional_scale_jit.1} parent=0 // loop_footer
    %s11 = sadd.s32 1, %s7
  $region7: #{_fractional_scale_jit.1} parent=0 // loop_footer_branch
    %6 = sbr.rel target = $region3
  $region8: #{_fractional_scale_jit.1} parent=0 // loop_exit
    _

</llo_original>
